<compile_context>
chip_gen: v6e
topology: v6e:2x2x1
jax: 0.10.0
libtpu: 0.0.40
codegen_flags: <defaults>
</compile_context>

<pallas_src>
import functools

import jax
import jax.numpy as jnp
from jax import lax
from jax.experimental import pallas as pl
from jax.experimental.pallas import tpu as pltpu

_EPS = 1e-12           # matches torch.nn.functional.normalize default eps
_INV_EPS = 1.0 / _EPS

_SUBLANE_MULTIPLE = {4: 8, 2: 16, 1: 32}


def _cdiv(a, b):
    return -(-a // b)


def _round_up(x, m):
    return _cdiv(x, m) * m


def _round_down(x, m):
    return (x // m) * m


# --------------------------- hardware-aware defaults ---------------------------
@functools.lru_cache(maxsize=1)
def _tpu_info():
    """(num_tensorcores, default double-buffered-input budget bytes, physical VMEM bytes)."""
    kind = ""
    try:
        kind = jax.devices()[0].device_kind.lower()
    except Exception:
        pass
    vmem_cap = None
    try:
        vmem_cap = int(pltpu.get_tpu_info().vmem_capacity_bytes)
    except Exception:
        vmem_cap = None
    if "v7" in kind or "7x" in kind:
        gen = 7
    elif "v6" in kind:
        gen = 6
    elif "v5" in kind:
        gen = 5
    else:
        gen = 0
    if vmem_cap is None:
        vmem_cap = (64 << 20) if gen == 7 else (128 << 20)
    num_tc = 2 if gen == 7 else 1          # v7x: 2 TensorCores/chip; v5e/v6e: 1
    # Double-buffered-input budgets: ~20 MiB v5e, ~48 MiB v6e, ~32 MiB v7x (64 MiB VMEM).
    budget = {7: 32 << 20, 6: 48 << 20, 5: 20 << 20}.get(gen, 24 << 20)
    # TODO(synk): on v7x, verify in a profile that the leading "parallel" grid axis is
    # sharded across both TensorCores; if not, switch it to pltpu.CORE_PARALLEL.
    return num_tc, budget, vmem_cap


# --------------------------- tile selection ---------------------------
def _divisor_tile(dim, multiple, max_tile):
    """Largest divisor of `dim` that is a multiple of `multiple` and <= max_tile, or None."""
    if dim % multiple != 0:
        return None
    best = None
    t = multiple
    lim = min(max_tile, dim)
    while t <= lim:
        if dim % t == 0:
            best = t
        t += multiple
    return best


def _choose_tiles(B, C, HW, itemsizes, sub, budget, hw_cap, want_par):
    """Pick (hw_tile, c_tile) so the double-buffered input blocks fit `budget`."""
    sum_item = sum(itemsizes)
    hw_cap = max(128, hw_cap)

    def pick_c(hw_t):
        max_c = budget // max(1, 2 * B * hw_t * sum_item)
        if max_c >= C:
            return C
        if C % sub == 0 and max_c >= sub:
            return _divisor_tile(C, sub, max_c)
        return None

    # -- HW tile --
    if want_par >= 2 and HW > 128:
        # Split HW across TensorCores even when HW % 128 != 0 (masked cdiv tiling).
        hw_tile = max(128, min(_round_up(_cdiv(HW, want_par), 128),
                               _round_down(hw_cap, 128)))
    elif HW <= hw_cap:
        hw_tile = HW                        # full dim is always a legal block extent
    else:
        base = _round_down(hw_cap, 128)
        d = _divisor_tile(HW, 128, base)    # prefer exact tiling (no masking) if close
        hw_tile = d if (d is not None and d >= base // 2) else base

    # -- C tile under budget; if even the minimum C block overshoots, shrink hw_tile --
    c_tile = pick_c(hw_tile)
    if c_tile is None:
        min_c = sub if C % sub == 0 else C
        fit = budget // max(1, 2 * B * min_c * sum_item)
        fit_tile = max(128, _round_down(fit, 128))
        if fit_tile < hw_tile and HW > 128:
            hw_tile = fit_tile
        c_tile = pick_c(hw_tile)
        if c_tile is None:
            c_tile = min_c                  # over budget; explicit vmem_limit covers it
            # TODO(synk): also tile the batch dimension for very large B*C blocks.
    return hw_tile, c_tile


# --------------------------- stage 1: streamed raw Gram ---------------------------
def _make_gram_kernel(n_t, inv_c, hw, hw_tile, hw_per_par, ragged):
    """Kernel over grid (n_par, hw_per_par, n_c); refs = inputs, outputs, att scratches."""

    def kernel(*refs):
        f_refs = refs[:n_t]
        o_refs = refs[n_t:2 * n_t]
        att_refs = refs[2 * n_t:]
        p = pl.program_id(0)            # parallel HW slice (TensorCore split on v7x)
        i = pl.program_id(1)            # HW-tile index within the slice
        k = pl.program_id(2)            # C-tile index (innermost reduction)
        nk = pl.num_programs(2)

        # sum over channels of f^2 for this (HW tile, C tile) block, per tensor
        contribs = []
        for f_ref in f_refs:
            f = f_ref[...].astype(jnp.float32)
            contribs.append(jnp.sum(f * f, axis=1))          # (B, hw_tile)

        @pl.when(k == 0)
        def _first_c_step():            # direct write: no zero-init + RMW pass
            for att, c in zip(att_refs, contribs):
                att[...] = c

        @pl.when(k != 0)
        def _accum_c_step():
            for att, c in zip(att_refs, contribs):
                att[...] += c

        @pl.when(jnp.logical_and(i == 0, k == 0))
        def _init_gram():
            for o in o_refs:
                o[...] = jnp.zeros_like(o)

        @pl.when(k == nk - 1)
        def _fold_tile():
            if ragged:
                tile_idx = p * hw_per_par + i
                col = (lax.broadcasted_iota(jnp.int32, (att_refs[0].shape[0], hw_tile), 1)
                       + tile_idx * hw_tile)
                valid = col < hw
            for o, att in zip(o_refs, att_refs):
                a = att[...] * inv_c                          # channel MEAN attention
                if ragged:
                    a = jnp.where(valid, a, 0.0)              # mask padded / phantom cols
                o[...] += lax.dot_general(a, a, (((1,), (1,)), ((), ())),
                                          preferred_element_type=jnp.float32)

    return kernel


def _gram_pallas(feats, *, hw_tile_cap=4096, input_budget_bytes=None, force_n_par=None):
    """Stream one or two same-shaped (B, C, H, W) feature maps once each (native dtype).
    Returns a tuple of per-tensor (n_par, B, B) f32 partial Grams of the channel-mean
    attention (1/C folded in).  Sum over axis 0 to get the full raw Gram."""
    B, C, H, W = feats[0].shape
    for f in feats[1:]:
        assert f.shape == feats[0].shape, "paired feature maps must share (B, C, H, W)"
    HW = H * W
    xs = [f.reshape(B, C, HW) for f in feats]                 # metadata-only reshape
    n_t = len(xs)
    itemsizes = [jnp.dtype(x.dtype).itemsize for x in xs]
    sub = max(_SUBLANE_MULTIPLE.get(s, 8) for s in itemsizes)

    num_tc, gen_budget, vmem_cap = _tpu_info()
    budget = gen_budget if input_budget_bytes is None else input_budget_bytes
    want_par = num_tc if force_n_par is None else force_n_par

    hw_tile, c_tile = _choose_tiles(B, C, HW, itemsizes, sub, budget, hw_tile_cap, want_par)
    n_c = C // c_tile
    n_hw = _cdiv(HW, hw_tile)
    n_par = max(1, min(want_par, n_hw))
    hw_per_par = _cdiv(n_hw, n_par)
    total_tiles = n_par * hw_per_par
    ragged = total_tiles * hw_tile != HW      # partial last tile and/or phantom tiles
    phantom = total_tiles > n_hw

    if phantom:
        def hw_index(p, i):                    # clamp phantom tiles onto a real block
            return jnp.minimum(p * hw_per_par + i, n_hw - 1)
    else:
        def hw_index(p, i):
            return p * hw_per_par + i

    kernel = _make_gram_kernel(n_t, 1.0 / float(C), HW, hw_tile, hw_per_par, ragged)

    # Explicit scoped-VMEM limit derived from the actual (layout-padded) footprint.
    in_bytes = 0
    for s in itemsizes:
        ss = _SUBLANE_MULTIPLE.get(s, 8)
        in_bytes += 2 * B * _round_up(c_tile, ss) * _round_up(hw_tile, 128) * s
    att_bytes = n_t * _round_up(B, 8) * _round_up(hw_tile, 128) * 4
    out_bytes = 2 * n_t * _round_up(B, 8) * _round_up(B, 128) * 4
    vmem_limit = int(min(max(in_bytes + att_bytes + out_bytes + (8 << 20), 32 << 20),
                         vmem_cap))

    flops = n_t * (3 * B * C * HW + 2 * B * B * HW)
    bytes_accessed = sum(B * C * HW * s for s in itemsizes) + n_t * n_par * B * B * 4

    out = pl.pallas_call(
        kernel,
        out_shape=tuple(jax.ShapeDtypeStruct((n_par, B, B), jnp.float32) for _ in xs),
        grid_spec=pltpu.PrefetchScalarGridSpec(
            num_scalar_prefetch=0,
            grid=(n_par, hw_per_par, n_c),
            in_specs=[pl.BlockSpec((B, c_tile, hw_tile),
                                   lambda p, i, k: (0, k, hw_index(p, i)))
                      for _ in xs],
            out_specs=tuple(pl.BlockSpec((None, B, B), lambda p, i, k: (p, 0, 0))
                            for _ in xs),
            scratch_shapes=[pltpu.VMEM((B, hw_tile), jnp.float32) for _ in xs],
        ),
        compiler_params=pltpu.CompilerParams(
            dimension_semantics=("parallel", "arbitrary", "arbitrary"),
            vmem_limit_bytes=vmem_limit),
        cost_estimate=pl.CostEstimate(flops=int(flops), transcendentals=0,
                                      bytes_accessed=int(bytes_accessed)),
    )(*xs)
    if not isinstance(out, (list, tuple)):
        out = (out,)
    return tuple(out)


# --------------------------- stage 2: tiny jnp epilogue (fused by XLA) ---------------------------
def _normalized_gram(g_raw):
    """Row-normalized Gram (torch F.normalize semantics, eps clamp) computed from the raw
    Gram of UNnormalized attention rows: n_i = max(sqrt(G[i,i]), eps)."""
    inv_n = jnp.minimum(lax.rsqrt(jnp.diagonal(g_raw)), _INV_EPS)        # (B,)
    g = g_raw * inv_n[:, None] * inv_n[None, :]
    inv_r = jnp.minimum(lax.rsqrt(jnp.sum(g * g, axis=1, keepdims=True)), _INV_EPS)
    return g * inv_r


def asp_loss_pallas(s_f, t_f, **tile_kwargs):
    """ASP loss for one (student, teacher) NCHW feature pair."""
    B = s_f.shape[0]
    assert t_f.shape[0] == B, "student/teacher batch sizes must match"
    if s_f.shape[1:] == t_f.shape[1:] and s_f.dtype == t_f.dtype:
        s_parts, t_parts = _gram_pallas((s_f, t_f), **tile_kwargs)   # one fused launch
    else:
        (s_parts,) = _gram_pallas((s_f,), **tile_kwargs)
        (t_parts,) = _gram_pallas((t_f,), **tile_kwargs)
    s_g = jnp.sum(s_parts, axis=0)          # (B, B) Gram of the channel-mean attention
    t_g = jnp.sum(t_parts, axis=0)
    d = _normalized_gram(t_g) - _normalized_gram(s_g)
    return jnp.sum(d * d) / (B * B)


def atten_similarity_pallas(s_g_list, t_g_list, **tile_kwargs):
    """Forward pass of AttenSimilarity: sum of per-pair ASP losses."""
    loss = jnp.float32(0.0)
    for s_f, t_f in zip(s_g_list, t_g_list):
        loss = loss + asp_loss_pallas(s_f, t_f, **tile_kwargs)
    return loss


# -------- pure-JAX reference (torch-faithful, sanity check only) --------
def _l2_normalize_rows(x):
    norm = jnp.sqrt(jnp.sum(x * x, axis=-1, keepdims=True))
    return x / jnp.maximum(norm, _EPS)


def _asp_loss_ref(s_f, t_f):
    def at(f):
        B = f.shape[0]
        a = jnp.mean(f.astype(jnp.float32) ** 2, axis=1).reshape(B, -1)
        return _l2_normalize_rows(a)

    B = s_f.shape[0]
    s_at, t_at = at(s_f), at(t_f)
    s_g = _l2_normalize_rows(s_at @ s_at.T)
    t_g = _l2_normalize_rows(t_at @ t_at.T)
    d = t_g - s_g
    return jnp.sum(d * d) / (B * B)


if __name__ == "__main__":
    key = jax.random.PRNGKey(0)
    ks = jax.random.split(key, 10)

    # (student, teacher) feature-map pairs; channel counts / dtypes may differ per pair,
    # only the batch size must match.  Pairs 2 and 3 share shape+dtype and exercise the
    # fused two-stream stage-1 launch; pair 3 streams native bf16.
    s_feats = [
        jax.random.normal(ks[0], (2, 4, 16, 16), dtype=jnp.float32),
        jax.random.normal(ks[1], (2, 8, 8, 8), dtype=jnp.float32),
        jax.random.normal(ks[2], (2, 8, 64, 64), dtype=jnp.float32).astype(jnp.bfloat16),
    ]
    t_feats = [
        jax.random.normal(ks[3], (2, 6, 16, 16), dtype=jnp.float32),
        jax.random.normal(ks[4], (2, 8, 8, 8), dtype=jnp.float32),
        jax.random.normal(ks[5], (2, 8, 64, 64), dtype=jnp.float32).astype(jnp.bfloat16),
    ]

    loss = atten_similarity_pallas(s_feats, t_feats)
    loss = jax.block_until_ready(loss)
    ref = sum(_asp_loss_ref(s, t) for s, t in zip(s_feats, t_feats))
    # Deferred normalization is mathematically identical to the torch-faithful reference;
    # residual f32 rounding gets amplified by the squared-difference loss, hence rtol=1e-3.
    assert jnp.allclose(loss, ref, rtol=1e-3, atol=1e-6), (loss, ref)

    # Multi-step grid: forced 2-way HW split + HW-tile loop + C-tile loop (exact tiling).
    s_big = jax.random.normal(ks[6], (2, 16, 32, 32), dtype=jnp.float32)
    t_big = jax.random.normal(ks[7], (2, 16, 32, 32), dtype=jnp.float32)
    (g_parts,) = _gram_pallas((s_big,), hw_tile_cap=128,
                              input_budget_bytes=16 * 1024, force_n_par=2)
    assert g_parts.shape[0] == 2                       # parallel HW split actually happened
    a_ref = jnp.mean(s_big.astype(jnp.float32) ** 2, axis=1).reshape(2, -1)
    assert jnp.allclose(jnp.sum(g_parts, axis=0), a_ref @ a_ref.T, rtol=1e-5, atol=1e-4)

    # Masked (ragged) HW tiling: HW = 28*28 = 784 is not a multiple of 128; the forced
    # 2-way split produces a partial last tile and one fully-masked phantom tile.
    s_rag = jax.random.normal(ks[8], (2, 8, 28, 28), dtype=jnp.float32)
    (g_rag,) = _gram_pallas((s_rag,), hw_tile_cap=128, force_n_par=2)
    a_rag = jnp.mean(s_rag.astype(jnp.float32) ** 2, axis=1).reshape(2, -1)
    assert jnp.allclose(jnp.sum(g_rag, axis=0), a_rag @ a_rag.T, rtol=1e-5, atol=1e-4)

    # End-to-end loss through the same forced multi-step / masked / fused-pair paths.
    tiled_loss = asp_loss_pallas(s_big, t_big, hw_tile_cap=128,
                                 input_budget_bytes=16 * 1024, force_n_par=2)
    tiled_loss = jax.block_until_ready(tiled_loss)
    tiled_ref = _asp_loss_ref(s_big, t_big)
    assert jnp.allclose(tiled_loss, tiled_ref, rtol=1e-3, atol=1e-6), (tiled_loss, tiled_ref)

    print("KERNEL_OK")
</pallas_src>

<mosaic_0001>
module attributes {stable_mosaic.version = 11 : i64} {
  func.func @kernel(%arg0: i32, %arg1: i32, %arg2: i32, %arg3: memref<2x4x256xf32, #tpu.memory_space<vmem>>, %arg4: memref<1x2x2xf32, #tpu.memory_space<vmem>>, %arg5: memref<2x256xf32, #tpu.memory_space<vmem>>) attributes {dimension_semantics = [#tpu.dimension_semantics<parallel>, #tpu.dimension_semantics<arbitrary>, #tpu.dimension_semantics<arbitrary>], iteration_bounds = array<i64: 1, 1, 1>, scalar_prefetch = 0 : i64, scratch_operands = 1 : i64, tpu.core_type = #tpu.core_type<tc>, window_params = [{transform_indices = @transform_0, window_bounds = array<i64: 2, 4, 256>}, {transform_indices = @transform_1, window_bounds = array<i64: 1, 2, 2>}]} {
    %c0 = arith.constant 0 : index
    %c0_0 = arith.constant 0 : index
    %c0_1 = arith.constant 0 : index
    %0 = vector.load %arg3[%c0, %c0_0, %c0_1] : memref<2x4x256xf32, #tpu.memory_space<vmem>>, vector<2x4x256xf32>
    %1 = arith.mulf %0, %0 : vector<2x4x256xf32>
    %cst = arith.constant dense<0.000000e+00> : vector<2x256xf32>
    %2 = vector.multi_reduction <add>, %1, %cst [1] : vector<2x4x256xf32> to vector<2x256xf32>
    %c0_i32 = arith.constant 0 : i32
    %3 = arith.cmpi eq, %arg2, %c0_i32 : i32
    %4 = arith.extui %3 : i1 to i32
    %c0_i32_2 = arith.constant 0 : i32
    %5 = arith.cmpi ne, %4, %c0_i32_2 : i32
    scf.if %5 {
      %c0_10 = arith.constant 0 : index
      %c0_11 = arith.constant 0 : index
      %17 = vector.load %arg5[%c0_10, %c0_11] : memref<2x256xf32, #tpu.memory_space<vmem>>, vector<2x256xf32>
      tpu.vector_store %arg5[%c0_10, %c0_11], %2 {strides = array<i32>} : memref<2x256xf32, #tpu.memory_space<vmem>>, vector<2x256xf32>,
    } else {
    }
    %c0_i32_3 = arith.constant 0 : i32
    %6 = arith.cmpi ne, %arg2, %c0_i32_3 : i32
    %7 = arith.extui %6 : i1 to i32
    %c0_i32_4 = arith.constant 0 : i32
    %8 = arith.cmpi ne, %7, %c0_i32_4 : i32
    scf.if %8 {
      %c0_10 = arith.constant 0 : index
      %c0_11 = arith.constant 0 : index
      %17 = vector.load %arg5[%c0_10, %c0_11] : memref<2x256xf32, #tpu.memory_space<vmem>>, vector<2x256xf32>
      %18 = arith.addf %17, %2 : vector<2x256xf32>
      %c0_12 = arith.constant 0 : index
      %c0_13 = arith.constant 0 : index
      %19 = vector.load %arg5[%c0_12, %c0_13] : memref<2x256xf32, #tpu.memory_space<vmem>>, vector<2x256xf32>
      tpu.vector_store %arg5[%c0_12, %c0_13], %18 {strides = array<i32>} : memref<2x256xf32, #tpu.memory_space<vmem>>, vector<2x256xf32>,
    } else {
    }
    %c0_i32_5 = arith.constant 0 : i32
    %9 = arith.cmpi eq, %arg1, %c0_i32_5 : i32
    %c0_i32_6 = arith.constant 0 : i32
    %10 = arith.cmpi eq, %arg2, %c0_i32_6 : i32
    %11 = arith.andi %9, %10 : i1
    %12 = arith.extui %11 : i1 to i32
    %c0_i32_7 = arith.constant 0 : i32
    %13 = arith.cmpi ne, %12, %c0_i32_7 : i32
    scf.if %13 {
      %cst_10 = arith.constant 0.000000e+00 : f32
      %17 = vector.broadcast %cst_10 : f32 to vector<2x2xf32>
      %c0_11 = arith.constant 0 : index
      %c0_12 = arith.constant 0 : index
      %c0_13 = arith.constant 0 : index
      %18 = vector.load %arg4[%c0_11, %c0_12, %c0_13] : memref<1x2x2xf32, #tpu.memory_space<vmem>>, vector<1x2x2xf32>
      %19 = vector.shape_cast %18 : vector<1x2x2xf32> to vector<2x2xf32>
      %20 = vector.shape_cast %17 : vector<2x2xf32> to vector<1x2x2xf32>
      tpu.vector_store %arg4[%c0_11, %c0_12, %c0_13], %20 {strides = array<i32>} : memref<1x2x2xf32, #tpu.memory_space<vmem>>, vector<1x2x2xf32>,
    } else {
    }
    %c0_i32_8 = arith.constant 0 : i32
    %14 = arith.cmpi eq, %arg2, %c0_i32_8 : i32
    %15 = arith.extui %14 : i1 to i32
    %c0_i32_9 = arith.constant 0 : i32
    %16 = arith.cmpi ne, %15, %c0_i32_9 : i32
    scf.if %16 {
      %c0_10 = arith.constant 0 : index
      %c0_11 = arith.constant 0 : index
      %17 = vector.load %arg5[%c0_10, %c0_11] : memref<2x256xf32, #tpu.memory_space<vmem>>, vector<2x256xf32>
      %cst_12 = arith.constant 2.500000e-01 : f32
      %18 = vector.broadcast %cst_12 : f32 to vector<2x256xf32>
      %19 = arith.mulf %17, %18 : vector<2x256xf32>
      %c0_13 = arith.constant 0 : index
      %c0_14 = arith.constant 0 : index
      %c0_15 = arith.constant 0 : index
      %20 = vector.load %arg4[%c0_13, %c0_14, %c0_15] : memref<1x2x2xf32, #tpu.memory_space<vmem>>, vector<1x2x2xf32>
      %21 = vector.shape_cast %20 : vector<1x2x2xf32> to vector<2x2xf32>
      %cst_16 = arith.constant dense<0.000000e+00> : vector<2x2xf32>
      %22 = tpu.matmul %19, %19, %cst_16 {dimension_numbers = #tpu.dot_dimension_numbers<[1], [1], [0], [0], [0, 0, 1, 0], [], []>} : vector<2x256xf32>, vector<2x256xf32>, vector<2x2xf32> -> vector<2x2xf32>
      %23 = arith.addf %21, %22 : vector<2x2xf32>
      %c0_17 = arith.constant 0 : index
      %c0_18 = arith.constant 0 : index
      %c0_19 = arith.constant 0 : index
      %24 = vector.load %arg4[%c0_17, %c0_18, %c0_19] : memref<1x2x2xf32, #tpu.memory_space<vmem>>, vector<1x2x2xf32>
      %25 = vector.shape_cast %24 : vector<1x2x2xf32> to vector<2x2xf32>
      %26 = vector.shape_cast %23 : vector<2x2xf32> to vector<1x2x2xf32>
      tpu.vector_store %arg4[%c0_17, %c0_18, %c0_19], %26 {strides = array<i32>} : memref<1x2x2xf32, #tpu.memory_space<vmem>>, vector<1x2x2xf32>,
    } else {
    }
    return
  }
  func.func @transform_0(%arg0: i32, %arg1: i32, %arg2: i32) -> (i32, i32, i32) {
    %c1_i32 = arith.constant 1 : i32
    %0 = arith.muli %arg0, %c1_i32 : i32
    %1 = arith.addi %0, %arg1 : i32
    %c0_i32 = arith.constant 0 : i32
    %c0_i32_0 = arith.constant 0 : i32
    return %c0_i32, %arg2, %1 : i32, i32, i32
  }
  func.func @transform_1(%arg0: i32, %arg1: i32, %arg2: i32) -> (i32, i32, i32) {
    %c0_i32 = arith.constant 0 : i32
    %c0_i32_0 = arith.constant 0 : i32
    %c0_i32_1 = arith.constant 0 : i32
    return %arg0, %c0_i32, %c0_i32_0 : i32, i32, i32
  }
}

</mosaic_0001>

<llo_original>
// kernel: tpu_custom_call.1
$region0: #{tpu_custom_call.1}
  #allocation0 [shape = 'u32[]', space=smem, size = 0x4, offset = 0x4, fixed_abs, tag = 'smem constant byte address 0x4 - core index']
  #allocation1 [shape = 'u32[144,128]{1,0:T(1,128)}', space=vmem, size = 0x12000, scoped, tag = 'internal scratch']
  #allocation2 [shape = 'f32[2,256]{1,0:T(2,128)}', space=vmem, size = 0x800, scoped, tag = 'scratch operand']
  %s0 = inlined_call_operand.hbm [shape: f32[2,4,256], index: 0, kind: input, shape index: {}]
  %s1 = inlined_call_operand.hbm [shape: f32[1,2,2], index: 1, kind: output, shape index: {}]
  %s2 = sld [smem:[#allocation0]]
  $region34: #{tpu_custom_call.1} parent=0
    _
  %s4 = ssub.s32 1, %s2
  %s5 = scalar_select 0, %s4, %s2
  $region1: #{tpu_custom_call.1} parent=0
    #allocation3 [shape = 'u8[8192]{0}', space=vmem, size = 0x2000, scoped, tag = 'input window, operand 0, single buffered']
    #allocation4 [shape = 's32[1]{0}', space=sflag, size = 0x4, scoped, tag = 'scoped memory for tpu_custom_call.1']
    #allocation5 [shape = 's32[1]{0}', space=sflag, size = 0x4, scoped, tag = 'scoped memory for tpu_custom_call.1']
    #allocation6 [shape = 'u8[1024]{0}', space=vmem, size = 0x400, scoped, tag = 'output window, operand 0, single buffered']
    %6 = vsyncpa [#allocation4], 0
    %7 = vsyncpa [#allocation5], 0
    // Predicated region
    $region2: #{tpu_custom_call.1} parent=1 // pred_check
      _
    $region3: #{tpu_custom_call.1} parent=1 // pred_check_branch
      %9 = sbr.rel (0) target = $region5
    $region4: #{tpu_custom_call.1} parent=1 // pred_region
      %s10 = sadd.s32 0, 0
      %s11 = smul.u32 2, %s10
      %s13 = ssub.s32 256, 256
      %14 = vsyncadd [#allocation4], %s13
      %s15 = smul.addr %s11, 64
      %s16 = scalar_lea.hbm %s0, %s15
      %s17 = sshll.u32 [#allocation3], 4
      %s18 = int_to_ptr.vmem [resolvable:$true] %s17
      %23 = dma.hbm_to_vmem [thread:$0]  %s16, 256, %s18, [#allocation4], 128, 128, 8
    $region5: #{tpu_custom_call.1} parent=1 // pred_fallthru
      _
    // Predicated region
    $region6: #{tpu_custom_call.1} parent=1 // pred_check
      _
    $region7: #{tpu_custom_call.1} parent=1 // pred_check_branch
      %25 = sbr.rel (0) target = $region9
    $region8: #{tpu_custom_call.1} parent=1 // pred_region
      %26 = dma.done [#allocation4], 256
    $region9: #{tpu_custom_call.1} parent=1 // pred_fallthru
      _
    %s27 = sadd.s32 0, 0
    %s28 = smul.u32 2, %s27
    %v29 = vld [vmem:[#allocation3] sm:$0xff]
    %v30 = vld [vmem:[#allocation3 + $0x8] sm:$0xff]
    %v31 = vmul.f32 %v29, %v29
    %v32 = vmul.f32 %v30, %v30
    %v35 = vcombine.high %v31, %v31
    %v36 = vcombine.high %v32, %v32
    %vm39 = vcmask 1043456
    %v40 = vsel %vm39, %v31, 0.0
    %v41 = vrot.slane %v40, 4
    %v42 = vadd.f32 %v40, %v41
    %v43 = vrot.slane %v42, 2
    %v44 = vadd.f32 %v42, %v43
    %v45 = vrot.slane %v44, 1
    %v46 = vadd.f32 %v44, %v45
    %v47 = vsel %vm39, %v35, 0.0
    %v48 = vrot.slane %v47, 4
    %v49 = vadd.f32 %v47, %v48
    %v50 = vrot.slane %v49, 2
    %v51 = vadd.f32 %v49, %v50
    %v52 = vrot.slane %v51, 1
    %v53 = vadd.f32 %v51, %v52
    %v54 = vsel %vm39, %v32, 0.0
    %v55 = vrot.slane %v54, 4
    %v56 = vadd.f32 %v54, %v55
    %v57 = vrot.slane %v56, 2
    %v58 = vadd.f32 %v56, %v57
    %v59 = vrot.slane %v58, 1
    %v60 = vadd.f32 %v58, %v59
    %v61 = vsel %vm39, %v36, 0.0
    %v62 = vrot.slane %v61, 4
    %v63 = vadd.f32 %v61, %v62
    %v64 = vrot.slane %v63, 2
    %v65 = vadd.f32 %v63, %v64
    %v66 = vrot.slane %v65, 1
    %v67 = vadd.f32 %v65, %v66
    %p68 = scmp.eq.s32.totalorder 0, 0
    // Predicated region
    $region10: #{tpu_custom_call.1} parent=1 // pred_check
      %p69 = pneg %p68
    $region11: #{tpu_custom_call.1} parent=1 // pred_check_branch
      %71 = sbr.rel (%p69) target = $region13
    $region12: #{tpu_custom_call.1} parent=1 // pred_region
      %v76 = vcombine.low %v46, %v53
      %v78 = vunpack.c.l.s4 1983009808
      %v79 = vunpack.c.0.s8 %v78
      %v80 = vlaneseq
      %v81 = vshrl.u32 %v80, 7
      %v82 = vsub.s32 %v79, %v81
      %v83 = vrot.slane %v76, %v82
      %v84 = vcombine.low %v60, %v67
      %v86 = vunpack.c.l.s4 1983009808
      %v87 = vunpack.c.0.s8 %v86
      %v88 = vlaneseq
      %v89 = vshrl.u32 %v88, 7
      %v90 = vsub.s32 %v87, %v89
      %v91 = vrot.slane %v84, %v90
      %vm92 = vcmask 1044484
      %v93 = vsel %vm92, %v83, %v83
      %vm94 = vcmask 1046534
      %v95 = vsel %vm94, %v83, %v93
      %v96 = vrot.slane %v91, 7
      %vm97 = vcmask 1041409
      %v98 = vsel %vm97, %v96, %v95
      %vm99 = vcmask 1043459
      %v100 = vsel %vm99, %v96, %v98
      %vm101 = vcmask 1045509
      %v102 = vsel %vm101, %v96, %v100
      %vm103 = vcmask 1047559
      %v104 = vsel %vm103, %v96, %v102
      %106 = vst [vmem:[#allocation2] sm:$0xf] %v104
    $region13: #{tpu_custom_call.1} parent=1 // pred_fallthru
      _
    %p107 = scmp.ne.s32.totalorder 0, 0
    // Predicated region
    $region14: #{tpu_custom_call.1} parent=1 // pred_check
      %p108 = pneg %p107
    $region15: #{tpu_custom_call.1} parent=1 // pred_check_branch
      %110 = sbr.rel (%p108) target = $region17
    $region16: #{tpu_custom_call.1} parent=1 // pred_region
      %v111 = vld [vmem:[#allocation2] sm:$0xf]
      %v116 = vcombine.low %v46, %v53
      %v118 = vunpack.c.l.s4 1983009808
      %v119 = vunpack.c.0.s8 %v118
      %v120 = vlaneseq
      %v121 = vshrl.u32 %v120, 7
      %v122 = vsub.s32 %v119, %v121
      %v123 = vrot.slane %v116, %v122
      %v124 = vcombine.low %v60, %v67
      %v126 = vunpack.c.l.s4 1983009808
      %v127 = vunpack.c.0.s8 %v126
      %v128 = vlaneseq
      %v129 = vshrl.u32 %v128, 7
      %v130 = vsub.s32 %v127, %v129
      %v131 = vrot.slane %v124, %v130
      %vm132 = vcmask 1044484
      %v133 = vsel %vm132, %v123, %v123
      %vm134 = vcmask 1046534
      %v135 = vsel %vm134, %v123, %v133
      %v136 = vrot.slane %v131, 7
      %vm137 = vcmask 1041409
      %v138 = vsel %vm137, %v136, %v135
      %vm139 = vcmask 1043459
      %v140 = vsel %vm139, %v136, %v138
      %vm141 = vcmask 1045509
      %v142 = vsel %vm141, %v136, %v140
      %vm143 = vcmask 1047559
      %v144 = vsel %vm143, %v136, %v142
      %v146 = vadd.f32 %v111, %v144
      %147 = vst [vmem:[#allocation2] sm:$0xf] %v146
    $region17: #{tpu_custom_call.1} parent=1 // pred_fallthru
      _
    %p148 = scmp.eq.s32.totalorder 0, 0
    %p149 = pnand %p148, %p68
    %p150 = pneg %p149
    // Predicated region
    $region18: #{tpu_custom_call.1} parent=1 // pred_check
      _
    $region19: #{tpu_custom_call.1} parent=1 // pred_check_branch
      %152 = sbr.rel (%p149) target = $region21
    $region20: #{tpu_custom_call.1} parent=1 // pred_region
      %vm153 = vcmask 9216
      %154 = vst.msk [vmem:[#allocation6] sm:$0x3] %vm153, 0.0
    $region21: #{tpu_custom_call.1} parent=1 // pred_fallthru
      _
    // Predicated region
    $region22: #{tpu_custom_call.1} parent=1 // pred_check
      %p155 = pneg %p68
    $region23: #{tpu_custom_call.1} parent=1 // pred_check_branch
      %157 = sbr.rel (%p155) target = $region25
    $region24: #{tpu_custom_call.1} parent=1 // pred_region
      %v158 = vld [vmem:[#allocation2] sm:$0xf]
      %v159 = vmul.f32 %v158, 0.25
      %v160 = vld [vmem:[#allocation6] sm:$0x3]
      %v163 = vunpack.c.l.s4 1983009808
      %v164 = vunpack.c.0.s8 %v163
      %v165 = vlaneseq
      %v166 = vshrl.u32 %v165, 7
      %v167 = vsub.s32 %v164, %v166
      %v168 = vrot.slane %v159, %v167
      %v169 = vcombine.high %v168, %v168
      %172 = vmatprep.subr.mxu0 0.0
      %173 = vmatpush1.xpose.msra.mxu0 0.0
      %174 = vmatprep.subr.mxu0 0.0
      %175 = vmatpush1.xpose.msra.mxu0 0.0
      %176 = vmatprep.subr.mxu0 0.0
      %177 = vmatpush1.xpose.msra.mxu0 0.0
      %178 = vmatprep.subr.mxu0 0.0
      %179 = vmatpush1.xpose.msra.mxu0 0.0
      %180 = vmatprep.subr.mxu0 0.0
      %181 = vmatpush1.xpose.msra.mxu0 0.0
      %182 = vmatprep.subr.mxu0 0.0
      %183 = vmatpush1.xpose.msra.mxu0 0.0
      %184 = vmatprep.subr.mxu0 0.0
      %185 = vmatpush1.xpose.msra.mxu0 0.0
      %186 = vmatprep.subr.mxu0 0.0
      %187 = vmatpush1.xpose.msra.mxu0 0.0
      %188 = vmatprep.subr.mxu0 0.0
      %189 = vmatpush1.xpose.msra.mxu0 0.0
      %190 = vmatprep.subr.mxu0 0.0
      %191 = vmatpush1.xpose.msra.mxu0 0.0
      %192 = vmatprep.subr.mxu0 0.0
      %193 = vmatpush1.xpose.msra.mxu0 0.0
      %194 = vmatprep.subr.mxu0 0.0
      %195 = vmatpush1.xpose.msra.mxu0 0.0
      %196 = vmatprep.subr.mxu0 0.0
      %197 = vmatpush1.xpose.msra.mxu0 0.0
      %198 = vmatprep.subr.mxu0 0.0
      %199 = vmatpush1.xpose.msra.mxu0 0.0
      %200 = vmatprep.subr.mxu0 0.0
      %201 = vmatpush1.xpose.msra.mxu0 0.0
      %202 = vmatprep.subr.mxu0 %v169
      %203 = vmatpush1.xpose.msra.mxu0 %v168
      %204 = vmatprep.subr.mxu0 0.0
      %205 = vmatpush2.xpose.msra.mxu0 0.0
      %206 = vmatprep.subr.mxu0 0.0
      %207 = vmatpush2.xpose.msra.mxu0 0.0
      %208 = vmatprep.subr.mxu0 0.0
      %209 = vmatpush2.xpose.msra.mxu0 0.0
      %210 = vmatprep.subr.mxu0 0.0
      %211 = vmatpush2.xpose.msra.mxu0 0.0
      %212 = vmatprep.subr.mxu0 0.0
      %213 = vmatpush2.xpose.msra.mxu0 0.0
      %214 = vmatprep.subr.mxu0 0.0
      %215 = vmatpush2.xpose.msra.mxu0 0.0
      %216 = vmatprep.subr.mxu0 0.0
      %217 = vmatpush2.xpose.msra.mxu0 0.0
      %218 = vmatprep.subr.mxu0 0.0
      %219 = vmatpush2.xpose.msra.mxu0 0.0
      %220 = vmatprep.subr.mxu0 0.0
      %221 = vmatpush2.xpose.msra.mxu0 0.0
      %222 = vmatprep.subr.mxu0 0.0
      %223 = vmatpush2.xpose.msra.mxu0 0.0
      %224 = vmatprep.subr.mxu0 0.0
      %225 = vmatpush2.xpose.msra.mxu0 0.0
      %226 = vmatprep.subr.mxu0 0.0
      %227 = vmatpush2.xpose.msra.mxu0 0.0
      %228 = vmatprep.subr.mxu0 0.0
      %229 = vmatpush2.xpose.msra.mxu0 0.0
      %230 = vmatprep.subr.mxu0 0.0
      %231 = vmatpush2.xpose.msra.mxu0 0.0
      %232 = vmatprep.subr.mxu0 0.0
      %233 = vmatpush2.xpose.msra.mxu0 0.0
      %234 = vmatprep.subr.mxu0 0.0
      %235 = vmatpush2.xpose.msra.mxu0 0.0
      %236 = vmatprep.mubr.f32.mxu0 %v169
      %237 = vmatmul.mubr.f32.gmra.mxu0 %v168
      %v238 = vpop.f32.mrf.mxu0
      %v239 = vadd.f32 0.0, %v238
      %v240 = vpop.f32.mrf.mxu0
      %241 = vdwg.mxu0
      %v242 = vadd.f32 %v160, %v239
      %vm243 = vcmask 9216
      %244 = vst.msk [vmem:[#allocation6] sm:$0x3] %vm243, %v242
    $region25: #{tpu_custom_call.1} parent=1 // pred_fallthru
      _
    // Predicated region
    $region26: #{tpu_custom_call.1} parent=1 // pred_check
      _
    $region27: #{tpu_custom_call.1} parent=1 // pred_check_branch
      %246 = sbr.rel (0) target = $region29
    $region28: #{tpu_custom_call.1} parent=1 // pred_region
      %s248 = ssub.s32 32, 32
      %249 = vsyncadd [#allocation5], %s248
      %s251 = sshll.u32 [#allocation6], 4
      %s252 = int_to_ptr.vmem [resolvable:$true] %s251
      %254 = dma.vmem_to_hbm [thread:$0]  %s252, 32, %s1, [#allocation5]
    $region29: #{tpu_custom_call.1} parent=1 // pred_fallthru
      _
    // Predicated region
    $region30: #{tpu_custom_call.1} parent=1 // pred_check
      _
    $region31: #{tpu_custom_call.1} parent=1 // pred_check_branch
      %256 = sbr.rel (0) target = $region33
    $region32: #{tpu_custom_call.1} parent=1 // pred_region
      %257 = dma.done [#allocation5], 32
    $region33: #{tpu_custom_call.1} parent=1 // pred_fallthru
      _
    %258 = vsyncpa [#allocation4], 1
    %259 = vsyncpa [#allocation5], 1

</llo_original>
